<compile_context>
chip_gen: v6e
topology: v6e:2x2x1
jax: 0.10.0
libtpu: 0.0.40
codegen_flags: <defaults>
</compile_context>

<pallas_src>
import numpy as np
import jax
import jax.numpy as jnp
from jax import lax
from jax.experimental import pallas as pl
from jax.experimental.pallas import tpu as pltpu

P = 128      # lane padding for embedding_dim / desc_hidden / packed gate tile
VPAD = 128   # lane padding for the one-hot vocab axis (in-kernel gather)


# -----------------------------------------------------------------------------
# Fused kernel: embedding gather + emb2hidden + layer-1 input projections
# (one pass over all rows), then the B-step 2-layer GRU recurrence as an
# in-kernel fori_loop, plus out[i, length-2] row selection.  grid=(1,).
# -----------------------------------------------------------------------------
def _word_encoder_pallas(off, lens, sel, ids, emb_tab, mlp_w, mlp_b, gru_w,
                         gru_b, *, n_pad, nb, b_pad, hdim, pdim, vpad):
    B = int(off.shape[0])

    def kernel(off_ref, len_ref, sel_ref,                      # scalar prefetch (SMEM)
               ids_ref, tab_ref, mlp_w_ref, mlp_b_ref, gru_w_ref, gru_b_ref,
               hid_ref, we_ref,                                # resident outputs
               gi1_ref, h1_ref, h2_ref):                       # VMEM scratch
        # ---- Phase 0: big lane-dense matmuls over all rows (done once). ----
        ids = ids_ref[...]                                               # (n_pad, 1) i32
        vcol = lax.broadcasted_iota(jnp.int32, (n_pad, vpad), 1)
        onehot = (vcol == ids).astype(jnp.float32)                       # (n_pad, vpad)
        emb = jnp.dot(onehot, tab_ref[...], preferred_element_type=jnp.float32)
        h = jnp.tanh(
            jnp.dot(emb, mlp_w_ref[0], preferred_element_type=jnp.float32)
            + mlp_b_ref[0])
        hid = jnp.tanh(
            jnp.dot(h, mlp_w_ref[1], preferred_element_type=jnp.float32)
            + mlp_b_ref[1])
        hid_ref[...] = hid            # written once; NOT read back below
        # Layer-1 input-path gate projection for all rows (bias added per step
        # after the pad mask is applied).
        gi1_ref[...] = jnp.dot(hid, gru_w_ref[0], preferred_element_type=jnp.float32)

        we_ref[...] = jnp.zeros_like(we_ref)
        h1_ref[...] = jnp.zeros_like(h1_ref)
        h2_ref[...] = jnp.zeros_like(h2_ref)

        # ---- Hoisted loop invariants (small: biases + iotas only). ----
        bi1 = gru_b_ref[0]
        bh1 = gru_b_ref[1]
        bi2 = gru_b_ref[2]
        bh2 = gru_b_ref[3]
        row_idx = lax.broadcasted_iota(jnp.int32, (nb, 1), 0)
        lane_lt_h = lax.broadcasted_iota(jnp.int32, (nb, pdim), 1) < hdim

        def gru_gates(gi, gh, hprev):
            # Gate stripes (lanes): [0,H)=n, [H,2H)=r, [2H,3H)=z, rest zero.
            a = jax.nn.sigmoid(gi + gh)                        # r @ [H,2H), z @ [2H,3H)
            r0 = pltpu.roll(a, shift=pdim - hdim, axis=1)      # r -> lanes [0,H)
            n = jnp.tanh(gi + r0 * gh)                         # n  @ lanes [0,H)
            z0 = pltpu.roll(a, shift=pdim - 2 * hdim, axis=1)  # z -> lanes [0,H)
            hnew = (1.0 - z0) * n + z0 * hprev
            return jnp.where(lane_lt_h, hnew, 0.0)

        # ---- Phase 1: B-step recurrence (the module's "time" axis = B). ----
        def step(i, carry):
            off_i = pl.multiple_of(off_ref[i], 8)      # host 8-aligns every sequence
            len_i = len_ref[i]
            sel_i = sel_ref[i]
            # in-kernel pad_sequence: rows >= len_i get zero input (-> bias only)
            win = gi1_ref[pl.ds(off_i, nb), :]
            gi1 = jnp.where(row_idx < len_i, win, 0.0) + bi1
            h1p = h1_ref[...]
            h2p = h2_ref[...]
            gh1 = jnp.dot(h1p, gru_w_ref[1], preferred_element_type=jnp.float32) + bh1
            h1n = gru_gates(gi1, gh1, h1p)
            gi2 = jnp.dot(h1n, gru_w_ref[2], preferred_element_type=jnp.float32) + bi2
            gh2 = jnp.dot(h2p, gru_w_ref[3], preferred_element_type=jnp.float32) + bh2
            h2n = gru_gates(gi2, gh2, h2p)
            h1_ref[...] = h1n
            h2_ref[...] = h2n
            # word_emb[i] = gru_out[i, batch_length[i] - 2]
            we_ref[pl.ds(i, 1), :] = h2_ref[pl.ds(sel_i, 1), :]
            return carry

        lax.fori_loop(0, B, step, 0)

    grid_spec = pltpu.PrefetchScalarGridSpec(
        num_scalar_prefetch=3,
        grid=(1,),
        in_specs=[
            pl.BlockSpec((n_pad, 1), lambda i, *_: (0, 0)),              # token ids
            pl.BlockSpec((vpad, pdim), lambda i, *_: (0, 0)),            # emb table
            pl.BlockSpec((2, pdim, pdim), lambda i, *_: (0, 0, 0)),      # mlp_w
            pl.BlockSpec((2, 1, pdim), lambda i, *_: (0, 0, 0)),         # mlp_b
            pl.BlockSpec((4, pdim, pdim), lambda i, *_: (0, 0, 0)),      # gru_w (gate-packed)
            pl.BlockSpec((4, 1, pdim), lambda i, *_: (0, 0, 0)),         # gru_b
        ],
        out_specs=[
            pl.BlockSpec((n_pad, pdim), lambda i, *_: (0, 0)),           # hid (emb2hidden)
            pl.BlockSpec((b_pad, pdim), lambda i, *_: (0, 0)),           # word_emb rows
        ],
        scratch_shapes=[pltpu.VMEM((n_pad, pdim), jnp.float32),          # gi1_all
                        pltpu.VMEM((nb, pdim), jnp.float32),             # h1
                        pltpu.VMEM((nb, pdim), jnp.float32)],            # h2
    )
    return pl.pallas_call(
        kernel,
        out_shape=(jax.ShapeDtypeStruct((n_pad, pdim), jnp.float32),
                   jax.ShapeDtypeStruct((b_pad, pdim), jnp.float32)),
        grid_spec=grid_spec,
        compiler_params=pltpu.CompilerParams(
            dimension_semantics=("arbitrary",)),
    )(off, lens, sel, ids, emb_tab, mlp_w, mlp_b, gru_w, gru_b)


# -----------------------------------------------------------------------------
# Parameter setup: logical (PyTorch-like) params + packed/padded kernel params.
# -----------------------------------------------------------------------------
def fold_bn(w, b, gamma, beta, mean, var, eps=1e-5):
    s = gamma / jnp.sqrt(var + eps)
    return (w * s[None, :]).astype(jnp.float32), ((b - mean) * s + beta).astype(jnp.float32)


def init_params(key, vocab, E, H):
    ks = jax.random.split(key, 16)

    def uni(k, shape, fan_in):
        bound = 1.0 / np.sqrt(fan_in)
        return jax.random.uniform(k, shape, jnp.float32, -bound, bound)

    logical = {}
    logical["embedding"] = jax.random.normal(ks[0], (vocab, E), jnp.float32)

    # fc_block1: Linear(E,H) + BatchNorm1d(H) (default running stats) + Tanh
    w1 = uni(ks[1], (E, H), E)
    b1 = uni(ks[2], (H,), E)
    logical["w1"], logical["b1"] = fold_bn(
        w1, b1, jnp.ones(H), jnp.zeros(H), jnp.zeros(H), jnp.ones(H))
    # fc_block2: Linear(H,H) + BatchNorm1d(H) + Tanh
    w2 = uni(ks[3], (H, H), H)
    b2 = uni(ks[4], (H,), H)
    logical["w2"], logical["b2"] = fold_bn(
        w2, b2, jnp.ones(H), jnp.zeros(H), jnp.zeros(H), jnp.ones(H))

    # GRU weights per gate (r, z, n), already transposed for x @ W.
    logical["wi1"] = uni(ks[5], (3, H, H), H)
    logical["wh1"] = uni(ks[6], (3, H, H), H)
    logical["bi1"] = uni(ks[7], (3, H), H)
    logical["bh1"] = uni(ks[8], (3, H), H)
    logical["wi2"] = uni(ks[9], (3, H, H), H)
    logical["wh2"] = uni(ks[10], (3, H, H), H)
    logical["bi2"] = uni(ks[11], (3, H), H)
    logical["bh2"] = uni(ks[12], (3, H), H)
    return logical


def pack_params(logical, E, H, pdim=P, vpad=VPAD):
    vocab = int(logical["embedding"].shape[0])
    assert E <= pdim, "TODO(synk): tile embedding_dim > 128 lanes."
    assert 3 * H <= pdim, "TODO(synk): widen gate packing for desc_hidden > 42."
    assert vocab <= vpad, "TODO(synk): tiled gather for vocab > 128."

    def pad_mat(w, rows, cols):
        out = jnp.zeros((rows, cols), jnp.float32)
        return out.at[:w.shape[0], :w.shape[1]].set(w)

    # Gate stripes inside ONE 128-lane tile: stripe 0 = n, 1 = r, 2 = z.
    # Logical gate order in the params is (r=0, z=1, n=2).
    stripe_gate = (2, 0, 1)

    def pack_gru_w(wg):          # (3,H,H) -> (pdim, pdim)
        out = jnp.zeros((pdim, pdim), jnp.float32)
        for s, g in enumerate(stripe_gate):
            out = out.at[:H, s * H:(s + 1) * H].set(wg[g])
        return out

    def pack_gru_b(bg):          # (3,H) -> (1, pdim)
        out = jnp.zeros((1, pdim), jnp.float32)
        for s, g in enumerate(stripe_gate):
            out = out.at[0, s * H:(s + 1) * H].set(bg[g])
        return out

    packed = {
        "emb_table": pad_mat(logical["embedding"], vpad, pdim),
        "mlp_w": jnp.stack([pad_mat(logical["w1"], pdim, pdim),
                            pad_mat(logical["w2"], pdim, pdim)]),
        "mlp_b": jnp.stack([pad_mat(logical["b1"][None, :], 1, pdim),
                            pad_mat(logical["b2"][None, :], 1, pdim)]),
        "gru_w": jnp.stack([pack_gru_w(logical["wi1"]), pack_gru_w(logical["wh1"]),
                            pack_gru_w(logical["wi2"]), pack_gru_w(logical["wh2"])]),
        "gru_b": jnp.stack([pack_gru_b(logical["bi1"]), pack_gru_b(logical["bh1"]),
                            pack_gru_b(logical["bi2"]), pack_gru_b(logical["bh2"])]),
        "E": E, "H": H, "P": pdim, "VPAD": vpad,
    }
    return packed


# -----------------------------------------------------------------------------
# WordEncoder.forward
# -----------------------------------------------------------------------------
def word_encoder_forward(batch_length, batch_words, packed):
    H, pdim, vpad = packed["H"], packed["P"], packed["VPAD"]
    lengths = [int(w.shape[0]) for w in batch_words]
    B, T_max = len(batch_words), max(lengths)

    NB = max(8, -(-T_max // 8) * 8)                   # GRU "batch" rows, sublane-padded
    seq_rows = [-(-l // 8) * 8 for l in lengths]      # 8-aligned per-sequence blocks
    offsets = np.concatenate([[0], np.cumsum(seq_rows)]).astype(np.int64)  # (B+1,)
    # Every (offset_i, NB) window the kernel reads must stay in bounds.
    N_pad = int(max(offsets[-1], offsets[B - 1] + NB))

    tokens = np.zeros((N_pad, 1), np.int32)
    for i, w in enumerate(batch_words):
        tokens[offsets[i]:offsets[i] + lengths[i], 0] = np.asarray(w, np.int32)

    off = jnp.asarray(offsets[:B], jnp.int32)
    lens = jnp.asarray(lengths, jnp.int32)
    # TODO(synk): PyTorch's out[i, length-2] wraps to the last row for length<2;
    # clamped to row 0 here (identical for length>=2).
    sel = jnp.asarray([max(0, int(l) - 2) for l in batch_length], jnp.int32)

    B_pad = -(-B // 8) * 8
    hid_pad, we_pad = _word_encoder_pallas(
        off, lens, sel, jnp.asarray(tokens),
        packed["emb_table"], packed["mlp_w"], packed["mlp_b"],
        packed["gru_w"], packed["gru_b"],
        n_pad=N_pad, nb=NB, b_pad=B_pad, hdim=H, pdim=pdim, vpad=vpad)

    embeddings = [hid_pad[int(offsets[i]):int(offsets[i]) + lengths[i], :H]
                  for i in range(B)]
    word_emb = we_pad[:B, :H]
    return word_emb, embeddings


# -----------------------------------------------------------------------------
# Pure-JAX reference (unpadded, per-gate math) for correctness checking.
# -----------------------------------------------------------------------------
def ref_forward(batch_length, batch_words, logical):
    H = logical["w1"].shape[1]
    lengths = [int(w.shape[0]) for w in batch_words]
    B, T_max = len(batch_words), max(lengths)

    all_tokens = jnp.concatenate(batch_words)
    emb = logical["embedding"][all_tokens]
    h = jnp.tanh(emb @ logical["w1"] + logical["b1"])
    hid = jnp.tanh(h @ logical["w2"] + logical["b2"])
    offsets = np.cumsum([0] + lengths)
    embeddings = [hid[offsets[i]:offsets[i + 1]] for i in range(B)]

    rnn_input = jnp.zeros((B, T_max, H), jnp.float32)
    for i in range(B):
        rnn_input = rnn_input.at[i, :lengths[i]].set(embeddings[i])

    def cell(x, hprev, wi, wh, bi, bh):
        r = jax.nn.sigmoid(x @ wi[0] + bi[0] + hprev @ wh[0] + bh[0])
        z = jax.nn.sigmoid(x @ wi[1] + bi[1] + hprev @ wh[1] + bh[1])
        n = jnp.tanh(x @ wi[2] + bi[2] + r * (hprev @ wh[2] + bh[2]))
        return (1.0 - z) * n + z * hprev

    h1 = jnp.zeros((T_max, H), jnp.float32)
    h2 = jnp.zeros((T_max, H), jnp.float32)
    outs = []
    for t in range(B):
        h1 = cell(rnn_input[t], h1, logical["wi1"], logical["wh1"],
                  logical["bi1"], logical["bh1"])
        h2 = cell(h1, h2, logical["wi2"], logical["wh2"],
                  logical["bi2"], logical["bh2"])
        outs.append(h2)
    gru_out = jnp.stack(outs)
    word_emb = jnp.stack(
        [gru_out[i, max(0, int(l) - 2)] for i, l in enumerate(batch_length)])
    return word_emb, embeddings


if __name__ == "__main__":
    VOCAB, E, H = 50, 32, 32
    key = jax.random.PRNGKey(0)
    kparams, kw0, kw1 = jax.random.split(key, 3)

    logical = init_params(kparams, VOCAB, E, H)
    packed = pack_params(logical, E, H)

    # Two variable-length word sequences (token indices) + their lengths.
    batch_words = [
        jax.random.randint(kw0, (5,), 0, VOCAB),
        jax.random.randint(kw1, (7,), 0, VOCAB),
    ]
    batch_length = [5, 7]

    word_emb, embeddings = word_encoder_forward(batch_length, batch_words, packed)
    word_emb = jax.block_until_ready(word_emb)
    embeddings = [jax.block_until_ready(e) for e in embeddings]

    ref_word_emb, ref_embeddings = ref_forward(batch_length, batch_words, logical)

    assert word_emb.shape == (len(batch_words), H)
    np.testing.assert_allclose(np.asarray(word_emb), np.asarray(ref_word_emb),
                               rtol=1e-3, atol=1e-3)
    for e, r in zip(embeddings, ref_embeddings):
        np.testing.assert_allclose(np.asarray(e), np.asarray(r),
                                   rtol=1e-3, atol=1e-3)

    print("KERNEL_OK")
</pallas_src>

<mosaic_0001>
module attributes {stable_mosaic.version = 11 : i64} {
  func.func @kernel(%arg0: i32, %arg1: memref<2xi32, #tpu.memory_space<smem>>, %arg2: memref<2xi32, #tpu.memory_space<smem>>, %arg3: memref<2xi32, #tpu.memory_space<smem>>, %arg4: memref<16x1xi32, #tpu.memory_space<vmem>>, %arg5: memref<128x128xf32, #tpu.memory_space<vmem>>, %arg6: memref<2x128x128xf32, #tpu.memory_space<vmem>>, %arg7: memref<2x1x128xf32, #tpu.memory_space<vmem>>, %arg8: memref<4x128x128xf32, #tpu.memory_space<vmem>>, %arg9: memref<4x1x128xf32, #tpu.memory_space<vmem>>, %arg10: memref<16x128xf32, #tpu.memory_space<vmem>>, %arg11: memref<8x128xf32, #tpu.memory_space<vmem>>, %arg12: memref<16x128xf32, #tpu.memory_space<vmem>>, %arg13: memref<8x128xf32, #tpu.memory_space<vmem>>, %arg14: memref<8x128xf32, #tpu.memory_space<vmem>>) attributes {dimension_semantics = [#tpu.dimension_semantics<arbitrary>], iteration_bounds = array<i64: 1>, scalar_prefetch = 3 : i64, scratch_operands = 3 : i64, tpu.core_type = #tpu.core_type<tc>, window_params = [{pipeline_mode = #tpu.pipeline_mode<synchronous>, transform_indices = @transform_0, window_bounds = array<i64: 16, 1>}, {pipeline_mode = #tpu.pipeline_mode<synchronous>, transform_indices = @transform_1, window_bounds = array<i64: 128, 128>}, {pipeline_mode = #tpu.pipeline_mode<synchronous>, transform_indices = @transform_2, window_bounds = array<i64: 2, 128, 128>}, {pipeline_mode = #tpu.pipeline_mode<synchronous>, transform_indices = @transform_3, window_bounds = array<i64: 2, 1, 128>}, {pipeline_mode = #tpu.pipeline_mode<synchronous>, transform_indices = @transform_4, window_bounds = array<i64: 4, 128, 128>}, {pipeline_mode = #tpu.pipeline_mode<synchronous>, transform_indices = @transform_5, window_bounds = array<i64: 4, 1, 128>}, {pipeline_mode = #tpu.pipeline_mode<synchronous>, transform_indices = @transform_6, window_bounds = array<i64: 16, 128>}, {pipeline_mode = #tpu.pipeline_mode<synchronous>, transform_indices = @transform_7, window_bounds = array<i64: 8, 128>}]} {
    %c0 = arith.constant 0 : index
    %c0_0 = arith.constant 0 : index
    %0 = vector.load %arg4[%c0, %c0_0] : memref<16x1xi32, #tpu.memory_space<vmem>>, vector<16x1xi32>
    %1 = tpu.iota {dimensions = array<i32: 1>} : vector<16x128xi32>
    %2 = vector.broadcast %0 : vector<16x1xi32> to vector<16x128xi32>
    %3 = arith.cmpi eq, %1, %2 : vector<16x128xi32>
    %4 = arith.extui %3 : vector<16x128xi1> to vector<16x128xi32>
    %5 = arith.sitofp %4 : vector<16x128xi32> to vector<16x128xf32>
    %c0_1 = arith.constant 0 : index
    %c0_2 = arith.constant 0 : index
    %6 = vector.load %arg5[%c0_1, %c0_2] : memref<128x128xf32, #tpu.memory_space<vmem>>, vector<128x128xf32>
    %cst = arith.constant dense<0.000000e+00> : vector<16x128xf32>
    %7 = tpu.matmul %5, %6, %cst {dimension_numbers = #tpu.dot_dimension_numbers<[1], [0], [0], [1], [0, 0, 1, 1], [], []>} : vector<16x128xf32>, vector<128x128xf32>, vector<16x128xf32> -> vector<16x128xf32>
    %c0_3 = arith.constant 0 : index
    %c0_4 = arith.constant 0 : index
    %c0_5 = arith.constant 0 : index
    %8 = vector.load %arg6[%c0_3, %c0_4, %c0_5] : memref<2x128x128xf32, #tpu.memory_space<vmem>>, vector<1x128x128xf32>
    %9 = vector.shape_cast %8 : vector<1x128x128xf32> to vector<128x128xf32>
    %cst_6 = arith.constant dense<0.000000e+00> : vector<16x128xf32>
    %10 = tpu.matmul %7, %9, %cst_6 {dimension_numbers = #tpu.dot_dimension_numbers<[1], [0], [0], [1], [0, 0, 1, 1], [], []>} : vector<16x128xf32>, vector<128x128xf32>, vector<16x128xf32> -> vector<16x128xf32>
    %c0_7 = arith.constant 0 : index
    %c0_8 = arith.constant 0 : index
    %c0_9 = arith.constant 0 : index
    %11 = vector.load %arg7[%c0_7, %c0_8, %c0_9] : memref<2x1x128xf32, #tpu.memory_space<vmem>>, vector<1x1x128xf32>
    %12 = vector.shape_cast %11 : vector<1x1x128xf32> to vector<1x128xf32>
    %13 = vector.broadcast %12 : vector<1x128xf32> to vector<16x128xf32>
    %14 = arith.addf %10, %13 : vector<16x128xf32>
    %15 = math.tanh %14 : vector<16x128xf32>
    %c1 = arith.constant 1 : index
    %c0_10 = arith.constant 0 : index
    %c0_11 = arith.constant 0 : index
    %16 = vector.load %arg6[%c1, %c0_10, %c0_11] : memref<2x128x128xf32, #tpu.memory_space<vmem>>, vector<1x128x128xf32>
    %17 = vector.shape_cast %16 : vector<1x128x128xf32> to vector<128x128xf32>
    %cst_12 = arith.constant dense<0.000000e+00> : vector<16x128xf32>
    %18 = tpu.matmul %15, %17, %cst_12 {dimension_numbers = #tpu.dot_dimension_numbers<[1], [0], [0], [1], [0, 0, 1, 1], [], []>} : vector<16x128xf32>, vector<128x128xf32>, vector<16x128xf32> -> vector<16x128xf32>
    %c1_13 = arith.constant 1 : index
    %c0_14 = arith.constant 0 : index
    %c0_15 = arith.constant 0 : index
    %19 = vector.load %arg7[%c1_13, %c0_14, %c0_15] : memref<2x1x128xf32, #tpu.memory_space<vmem>>, vector<1x1x128xf32>
    %20 = vector.shape_cast %19 : vector<1x1x128xf32> to vector<1x128xf32>
    %21 = vector.broadcast %20 : vector<1x128xf32> to vector<16x128xf32>
    %22 = arith.addf %18, %21 : vector<16x128xf32>
    %23 = math.tanh %22 : vector<16x128xf32>
    %c0_16 = arith.constant 0 : index
    %c0_17 = arith.constant 0 : index
    %24 = vector.load %arg10[%c0_16, %c0_17] : memref<16x128xf32, #tpu.memory_space<vmem>>, vector<16x128xf32>
    tpu.vector_store %arg10[%c0_16, %c0_17], %23 {strides = array<i32>} : memref<16x128xf32, #tpu.memory_space<vmem>>, vector<16x128xf32>,
    %c0_18 = arith.constant 0 : index
    %c0_19 = arith.constant 0 : index
    %c0_20 = arith.constant 0 : index
    %25 = vector.load %arg8[%c0_18, %c0_19, %c0_20] : memref<4x128x128xf32, #tpu.memory_space<vmem>>, vector<1x128x128xf32>
    %26 = vector.shape_cast %25 : vector<1x128x128xf32> to vector<128x128xf32>
    %cst_21 = arith.constant dense<0.000000e+00> : vector<16x128xf32>
    %27 = tpu.matmul %23, %26, %cst_21 {dimension_numbers = #tpu.dot_dimension_numbers<[1], [0], [0], [1], [0, 0, 1, 1], [], []>} : vector<16x128xf32>, vector<128x128xf32>, vector<16x128xf32> -> vector<16x128xf32>
    %c0_22 = arith.constant 0 : index
    %c0_23 = arith.constant 0 : index
    %28 = vector.load %arg12[%c0_22, %c0_23] : memref<16x128xf32, #tpu.memory_space<vmem>>, vector<16x128xf32>
    tpu.vector_store %arg12[%c0_22, %c0_23], %27 {strides = array<i32>} : memref<16x128xf32, #tpu.memory_space<vmem>>, vector<16x128xf32>,
    %cst_24 = arith.constant 0.000000e+00 : f32
    %29 = vector.broadcast %cst_24 : f32 to vector<8x128xf32>
    %c0_25 = arith.constant 0 : index
    %c0_26 = arith.constant 0 : index
    %30 = vector.load %arg11[%c0_25, %c0_26] : memref<8x128xf32, #tpu.memory_space<vmem>>, vector<8x128xf32>
    tpu.vector_store %arg11[%c0_25, %c0_26], %29 {strides = array<i32>} : memref<8x128xf32, #tpu.memory_space<vmem>>, vector<8x128xf32>,
    %cst_27 = arith.constant 0.000000e+00 : f32
    %31 = vector.broadcast %cst_27 : f32 to vector<8x128xf32>
    %c0_28 = arith.constant 0 : index
    %c0_29 = arith.constant 0 : index
    %32 = vector.load %arg13[%c0_28, %c0_29] : memref<8x128xf32, #tpu.memory_space<vmem>>, vector<8x128xf32>
    tpu.vector_store %arg13[%c0_28, %c0_29], %31 {strides = array<i32>} : memref<8x128xf32, #tpu.memory_space<vmem>>, vector<8x128xf32>,
    %cst_30 = arith.constant 0.000000e+00 : f32
    %33 = vector.broadcast %cst_30 : f32 to vector<8x128xf32>
    %c0_31 = arith.constant 0 : index
    %c0_32 = arith.constant 0 : index
    %34 = vector.load %arg14[%c0_31, %c0_32] : memref<8x128xf32, #tpu.memory_space<vmem>>, vector<8x128xf32>
    tpu.vector_store %arg14[%c0_31, %c0_32], %33 {strides = array<i32>} : memref<8x128xf32, #tpu.memory_space<vmem>>, vector<8x128xf32>,
    %c0_33 = arith.constant 0 : index
    %c0_34 = arith.constant 0 : index
    %c0_35 = arith.constant 0 : index
    %35 = vector.load %arg9[%c0_33, %c0_34, %c0_35] : memref<4x1x128xf32, #tpu.memory_space<vmem>>, vector<1x1x128xf32>
    %36 = vector.shape_cast %35 : vector<1x1x128xf32> to vector<1x128xf32>
    %c1_36 = arith.constant 1 : index
    %c0_37 = arith.constant 0 : index
    %c0_38 = arith.constant 0 : index
    %37 = vector.load %arg9[%c1_36, %c0_37, %c0_38] : memref<4x1x128xf32, #tpu.memory_space<vmem>>, vector<1x1x128xf32>
    %38 = vector.shape_cast %37 : vector<1x1x128xf32> to vector<1x128xf32>
    %c2 = arith.constant 2 : index
    %c0_39 = arith.constant 0 : index
    %c0_40 = arith.constant 0 : index
    %39 = vector.load %arg9[%c2, %c0_39, %c0_40] : memref<4x1x128xf32, #tpu.memory_space<vmem>>, vector<1x1x128xf32>
    %40 = vector.shape_cast %39 : vector<1x1x128xf32> to vector<1x128xf32>
    %c3 = arith.constant 3 : index
    %c0_41 = arith.constant 0 : index
    %c0_42 = arith.constant 0 : index
    %41 = vector.load %arg9[%c3, %c0_41, %c0_42] : memref<4x1x128xf32, #tpu.memory_space<vmem>>, vector<1x1x128xf32>
    %42 = vector.shape_cast %41 : vector<1x1x128xf32> to vector<1x128xf32>
    %43 = tpu.iota {dimensions = array<i32: 0>} : vector<8x1xi32>
    %44 = tpu.iota {dimensions = array<i32: 1>} : vector<8x128xi32>
    %c32_i32 = arith.constant 32 : i32
    %45 = vector.broadcast %c32_i32 : i32 to vector<8x128xi32>
    %46 = arith.cmpi slt, %44, %45 : vector<8x128xi32>
    %c0_i32 = arith.constant 0 : i32
    %c2_i32 = arith.constant 2 : i32
    %47 = arith.addi %c0_i32, %c2_i32 : i32
    %c1_i32 = arith.constant 1 : i32
    scf.for %arg15 = %c0_i32 to %47 step %c1_i32  : i32 {
      %48 = arith.index_cast %arg15 : i32 to index
      %49 = memref.load %arg1[%48] : memref<2xi32, #tpu.memory_space<smem>>
      %50 = tpu.assume_multiple %49, 8 : i32
      %51 = arith.index_cast %arg15 : i32 to index
      %52 = memref.load %arg2[%51] : memref<2xi32, #tpu.memory_space<smem>>
      %53 = arith.index_cast %arg15 : i32 to index
      %54 = memref.load %arg3[%53] : memref<2xi32, #tpu.memory_space<smem>>
      %55 = arith.index_cast %50 : i32 to index
      %c0_44 = arith.constant 0 : index
      %56 = vector.load %arg12[%55, %c0_44] : memref<16x128xf32, #tpu.memory_space<vmem>>, vector<8x128xf32>
      %57 = vector.broadcast %52 : i32 to vector<8x1xi32>
      %58 = arith.cmpi slt, %43, %57 : vector<8x1xi32>
      %cst_45 = arith.constant 0.000000e+00 : f32
      %59 = vector.shape_cast %58 : vector<8x1xi1> to vector<8x1xi1>
      %60 = vector.broadcast %59 : vector<8x1xi1> to vector<8x128xi1>
      %61 = vector.broadcast %cst_45 : f32 to vector<8x128xf32>
      %62 = arith.select %60, %56, %61 : vector<8x128xi1>, vector<8x128xf32>
      %63 = vector.broadcast %36 : vector<1x128xf32> to vector<8x128xf32>
      %64 = arith.addf %62, %63 : vector<8x128xf32>
      %c0_46 = arith.constant 0 : index
      %c0_47 = arith.constant 0 : index
      %65 = vector.load %arg13[%c0_46, %c0_47] : memref<8x128xf32, #tpu.memory_space<vmem>>, vector<8x128xf32>
      %c0_48 = arith.constant 0 : index
      %c0_49 = arith.constant 0 : index
      %66 = vector.load %arg14[%c0_48, %c0_49] : memref<8x128xf32, #tpu.memory_space<vmem>>, vector<8x128xf32>
      %c1_50 = arith.constant 1 : index
      %c0_51 = arith.constant 0 : index
      %c0_52 = arith.constant 0 : index
      %67 = vector.load %arg8[%c1_50, %c0_51, %c0_52] : memref<4x128x128xf32, #tpu.memory_space<vmem>>, vector<1x128x128xf32>
      %68 = vector.shape_cast %67 : vector<1x128x128xf32> to vector<128x128xf32>
      %cst_53 = arith.constant dense<0.000000e+00> : vector<8x128xf32>
      %69 = tpu.matmul %65, %68, %cst_53 {dimension_numbers = #tpu.dot_dimension_numbers<[1], [0], [0], [1], [0, 0, 1, 1], [], []>} : vector<8x128xf32>, vector<128x128xf32>, vector<8x128xf32> -> vector<8x128xf32>
      %70 = vector.broadcast %38 : vector<1x128xf32> to vector<8x128xf32>
      %71 = arith.addf %69, %70 : vector<8x128xf32>
      %72 = arith.addf %64, %71 : vector<8x128xf32>
      %73 = arith.negf %72 : vector<8x128xf32>
      %74 = math.exp %73 : vector<8x128xf32>
      %cst_54 = arith.constant 1.000000e+00 : f32
      %75 = vector.broadcast %cst_54 : f32 to vector<8x128xf32>
      %76 = arith.addf %75, %74 : vector<8x128xf32>
      %77 = arith.divf %75, %76 : vector<8x128xf32>
      %c96_i32 = arith.constant 96 : i32
      %78 = tpu.dynamic_rotate %77 by %c96_i32 dim 1 : vector<8x128xf32>, i32 -> vector<8x128xf32>
      %79 = arith.mulf %78, %71 : vector<8x128xf32>
      %80 = arith.addf %64, %79 : vector<8x128xf32>
      %81 = math.tanh %80 : vector<8x128xf32>
      %c64_i32 = arith.constant 64 : i32
      %82 = tpu.dynamic_rotate %77 by %c64_i32 dim 1 : vector<8x128xf32>, i32 -> vector<8x128xf32>
      %cst_55 = arith.constant 1.000000e+00 : f32
      %83 = vector.broadcast %cst_55 : f32 to vector<8x128xf32>
      %84 = arith.subf %83, %82 : vector<8x128xf32>
      %85 = arith.mulf %84, %81 : vector<8x128xf32>
      %86 = arith.mulf %82, %65 : vector<8x128xf32>
      %87 = arith.addf %85, %86 : vector<8x128xf32>
      %cst_56 = arith.constant 0.000000e+00 : f32
      %88 = vector.broadcast %cst_56 : f32 to vector<8x128xf32>
      %89 = arith.select %46, %87, %88 : vector<8x128xi1>, vector<8x128xf32>
      %c2_57 = arith.constant 2 : index
      %c0_58 = arith.constant 0 : index
      %c0_59 = arith.constant 0 : index
      %90 = vector.load %arg8[%c2_57, %c0_58, %c0_59] : memref<4x128x128xf32, #tpu.memory_space<vmem>>, vector<1x128x128xf32>
      %91 = vector.shape_cast %90 : vector<1x128x128xf32> to vector<128x128xf32>
      %cst_60 = arith.constant dense<0.000000e+00> : vector<8x128xf32>
      %92 = tpu.matmul %89, %91, %cst_60 {dimension_numbers = #tpu.dot_dimension_numbers<[1], [0], [0], [1], [0, 0, 1, 1], [], []>} : vector<8x128xf32>, vector<128x128xf32>, vector<8x128xf32> -> vector<8x128xf32>
      %93 = vector.broadcast %40 : vector<1x128xf32> to vector<8x128xf32>
      %94 = arith.addf %92, %93 : vector<8x128xf32>
      %c3_61 = arith.constant 3 : index
      %c0_62 = arith.constant 0 : index
      %c0_63 = arith.constant 0 : index
      %95 = vector.load %arg8[%c3_61, %c0_62, %c0_63] : memref<4x128x128xf32, #tpu.memory_space<vmem>>, vector<1x128x128xf32>
      %96 = vector.shape_cast %95 : vector<1x128x128xf32> to vector<128x128xf32>
      %cst_64 = arith.constant dense<0.000000e+00> : vector<8x128xf32>
      %97 = tpu.matmul %66, %96, %cst_64 {dimension_numbers = #tpu.dot_dimension_numbers<[1], [0], [0], [1], [0, 0, 1, 1], [], []>} : vector<8x128xf32>, vector<128x128xf32>, vector<8x128xf32> -> vector<8x128xf32>
      %98 = vector.broadcast %42 : vector<1x128xf32> to vector<8x128xf32>
      %99 = arith.addf %97, %98 : vector<8x128xf32>
      %100 = arith.addf %94, %99 : vector<8x128xf32>
      %101 = arith.negf %100 : vector<8x128xf32>
      %102 = math.exp %101 : vector<8x128xf32>
      %cst_65 = arith.constant 1.000000e+00 : f32
      %103 = vector.broadcast %cst_65 : f32 to vector<8x128xf32>
      %104 = arith.addf %103, %102 : vector<8x128xf32>
      %105 = arith.divf %103, %104 : vector<8x128xf32>
      %c96_i32_66 = arith.constant 96 : i32
      %106 = tpu.dynamic_rotate %105 by %c96_i32_66 dim 1 : vector<8x128xf32>, i32 -> vector<8x128xf32>
      %107 = arith.mulf %106, %99 : vector<8x128xf32>
      %108 = arith.addf %94, %107 : vector<8x128xf32>
      %109 = math.tanh %108 : vector<8x128xf32>
      %c64_i32_67 = arith.constant 64 : i32
      %110 = tpu.dynamic_rotate %105 by %c64_i32_67 dim 1 : vector<8x128xf32>, i32 -> vector<8x128xf32>
      %cst_68 = arith.constant 1.000000e+00 : f32
      %111 = vector.broadcast %cst_68 : f32 to vector<8x128xf32>
      %112 = arith.subf %111, %110 : vector<8x128xf32>
      %113 = arith.mulf %112, %109 : vector<8x128xf32>
      %114 = arith.mulf %110, %66 : vector<8x128xf32>
      %115 = arith.addf %113, %114 : vector<8x128xf32>
      %cst_69 = arith.constant 0.000000e+00 : f32
      %116 = vector.broadcast %cst_69 : f32 to vector<8x128xf32>
      %117 = arith.select %46, %115, %116 : vector<8x128xi1>, vector<8x128xf32>
      %c0_70 = arith.constant 0 : index
      %c0_71 = arith.constant 0 : index
      %118 = vector.load %arg13[%c0_70, %c0_71] : memref<8x128xf32, #tpu.memory_space<vmem>>, vector<8x128xf32>
      tpu.vector_store %arg13[%c0_70, %c0_71], %89 {strides = array<i32>} : memref<8x128xf32, #tpu.memory_space<vmem>>, vector<8x128xf32>,
      %c0_72 = arith.constant 0 : index
      %c0_73 = arith.constant 0 : index
      %119 = vector.load %arg14[%c0_72, %c0_73] : memref<8x128xf32, #tpu.memory_space<vmem>>, vector<8x128xf32>
      tpu.vector_store %arg14[%c0_72, %c0_73], %117 {strides = array<i32>} : memref<8x128xf32, #tpu.memory_space<vmem>>, vector<8x128xf32>,
      %120 = arith.index_cast %54 : i32 to index
      %c0_74 = arith.constant 0 : index
      %121 = vector.load %arg14[%120, %c0_74] : memref<8x128xf32, #tpu.memory_space<vmem>>, vector<1x128xf32>
      %122 = arith.index_cast %arg15 : i32 to index
      %c0_75 = arith.constant 0 : index
      %123 = vector.load %arg11[%122, %c0_75] : memref<8x128xf32, #tpu.memory_space<vmem>>, vector<1x128xf32>
      tpu.vector_store %arg11[%122, %c0_75], %121 {strides = array<i32>} : memref<8x128xf32, #tpu.memory_space<vmem>>, vector<1x128xf32>,
    }
    %c2_i32_43 = arith.constant 2 : i32
    return
  }
  func.func @transform_0(%arg0: i32, %arg1: memref<2xi32, #tpu.memory_space<smem>>, %arg2: memref<2xi32, #tpu.memory_space<smem>>, %arg3: memref<2xi32, #tpu.memory_space<smem>>) -> (i32, i32) {
    %c0_i32 = arith.constant 0 : i32
    %c0_i32_0 = arith.constant 0 : i32
    %c0_i32_1 = arith.constant 0 : i32
    return %c0_i32, %c0_i32_0 : i32, i32
  }
  func.func @transform_1(%arg0: i32, %arg1: memref<2xi32, #tpu.memory_space<smem>>, %arg2: memref<2xi32, #tpu.memory_space<smem>>, %arg3: memref<2xi32, #tpu.memory_space<smem>>) -> (i32, i32) {
    %c0_i32 = arith.constant 0 : i32
    %c0_i32_0 = arith.constant 0 : i32
    %c0_i32_1 = arith.constant 0 : i32
    return %c0_i32, %c0_i32_0 : i32, i32
  }
  func.func @transform_2(%arg0: i32, %arg1: memref<2xi32, #tpu.memory_space<smem>>, %arg2: memref<2xi32, #tpu.memory_space<smem>>, %arg3: memref<2xi32, #tpu.memory_space<smem>>) -> (i32, i32, i32) {
    %c0_i32 = arith.constant 0 : i32
    %c0_i32_0 = arith.constant 0 : i32
    %c0_i32_1 = arith.constant 0 : i32
    %c0_i32_2 = arith.constant 0 : i32
    return %c0_i32, %c0_i32_0, %c0_i32_1 : i32, i32, i32
  }
  func.func @transform_3(%arg0: i32, %arg1: memref<2xi32, #tpu.memory_space<smem>>, %arg2: memref<2xi32, #tpu.memory_space<smem>>, %arg3: memref<2xi32, #tpu.memory_space<smem>>) -> (i32, i32, i32) {
    %c0_i32 = arith.constant 0 : i32
    %c0_i32_0 = arith.constant 0 : i32
    %c0_i32_1 = arith.constant 0 : i32
    %c0_i32_2 = arith.constant 0 : i32
    return %c0_i32, %c0_i32_0, %c0_i32_1 : i32, i32, i32
  }
  func.func @transform_4(%arg0: i32, %arg1: memref<2xi32, #tpu.memory_space<smem>>, %arg2: memref<2xi32, #tpu.memory_space<smem>>, %arg3: memref<2xi32, #tpu.memory_space<smem>>) -> (i32, i32, i32) {
    %c0_i32 = arith.constant 0 : i32
    %c0_i32_0 = arith.constant 0 : i32
    %c0_i32_1 = arith.constant 0 : i32
    %c0_i32_2 = arith.constant 0 : i32
    return %c0_i32, %c0_i32_0, %c0_i32_1 : i32, i32, i32
  }
  func.func @transform_5(%arg0: i32, %arg1: memref<2xi32, #tpu.memory_space<smem>>, %arg2: memref<2xi32, #tpu.memory_space<smem>>, %arg3: memref<2xi32, #tpu.memory_space<smem>>) -> (i32, i32, i32) {
    %c0_i32 = arith.constant 0 : i32
    %c0_i32_0 = arith.constant 0 : i32
    %c0_i32_1 = arith.constant 0 : i32
    %c0_i32_2 = arith.constant 0 : i32
    return %c0_i32, %c0_i32_0, %c0_i32_1 : i32, i32, i32
  }
  func.func @transform_6(%arg0: i32, %arg1: memref<2xi32, #tpu.memory_space<smem>>, %arg2: memref<2xi32, #tpu.memory_space<smem>>, %arg3: memref<2xi32, #tpu.memory_space<smem>>) -> (i32, i32) {
    %c0_i32 = arith.constant 0 : i32
    %c0_i32_0 = arith.constant 0 : i32
    %c0_i32_1 = arith.constant 0 : i32
    return %c0_i32, %c0_i32_0 : i32, i32
  }
  func.func @transform_7(%arg0: i32, %arg1: memref<2xi32, #tpu.memory_space<smem>>, %arg2: memref<2xi32, #tpu.memory_space<smem>>, %arg3: memref<2xi32, #tpu.memory_space<smem>>) -> (i32, i32) {
    %c0_i32 = arith.constant 0 : i32
    %c0_i32_0 = arith.constant 0 : i32
    %c0_i32_1 = arith.constant 0 : i32
    return %c0_i32, %c0_i32_0 : i32, i32
  }
}

</mosaic_0001>

<llo_original>
// kernel: tpu_custom_call.1
$region0: #{tpu_custom_call.1}
  #allocation0 [shape = 'u32[]', space=smem, size = 0x4, offset = 0x4, fixed_abs, tag = 'smem constant byte address 0x4 - core index']
  #allocation1 [shape = 'u32[144,128]{1,0:T(1,128)}', space=vmem, size = 0x12000, scoped, tag = 'internal scratch']
  #allocation2 [shape = 'f32[16,128]{1,0:T(8,128)}', space=vmem, size = 0x2000, scoped, tag = 'scratch operand']
  #allocation3 [shape = 'f32[8,128]{1,0:T(8,128)}', space=vmem, size = 0x1000, scoped, tag = 'scratch operand']
  #allocation4 [shape = 'f32[8,128]{1,0:T(8,128)}', space=vmem, size = 0x1000, scoped, tag = 'scratch operand']
  #allocation5 [shape = 's32[1]{0}', space=sflag, size = 0x4, scoped, tag = 'scoped memory for tpu_custom_call.1']
  #allocation6 [shape = 'u8[512]{0}', space=smem, size = 0x200, scoped, tag = 'prefetched SMEM operand 0']
  #allocation7 [shape = 'u8[512]{0}', space=smem, size = 0x200, scoped, tag = 'prefetched SMEM operand 1']
  #allocation8 [shape = 'u8[512]{0}', space=smem, size = 0x200, scoped, tag = 'prefetched SMEM operand 2']
  %s0 = inlined_call_operand.vmem [shape: s32[2], index: 0, kind: input, shape index: {}]
  %s1 = inlined_call_operand.vmem [shape: s32[2], index: 1, kind: input, shape index: {}]
  %s2 = inlined_call_operand.vmem [shape: s32[2], index: 2, kind: input, shape index: {}]
  %s3 = inlined_call_operand.vmem [shape: s32[16,1], index: 3, kind: input, shape index: {}]
  %s4 = inlined_call_operand.hbm [shape: f32[128,128], index: 4, kind: input, shape index: {}]
  %s5 = inlined_call_operand.hbm [shape: f32[2,128,128], index: 5, kind: input, shape index: {}]
  %s6 = inlined_call_operand.vmem [shape: f32[2,1,128], index: 6, kind: input, shape index: {}]
  %s7 = inlined_call_operand.hbm [shape: f32[4,128,128], index: 7, kind: input, shape index: {}]
  %s8 = inlined_call_operand.vmem [shape: f32[4,1,128], index: 8, kind: input, shape index: {}]
  %s9 = inlined_call_operand.hbm [shape: f32[16,128], index: 9, kind: output, shape index: {0}]
  %s10 = inlined_call_operand.hbm [shape: f32[8,128], index: 10, kind: output, shape index: {1}]
  %11 = xla_tuple %s9, %s10
  %s12 = sld [smem:[#allocation0]]
  $region61: #{tpu_custom_call.1} parent=0
    _
  %s14 = ssub.s32 1, %s12
  %s15 = scalar_select 0, %s14, %s12
  %s16 = sshll.u32 %s0, 4
  %s17 = int_to_ptr.vmem [resolvable:$true] %s16
  %19 = dma.vmem_to_smem %s17, 16, [#allocation6], [#allocation5]
  %s20 = sshll.u32 %s1, 4
  %s21 = int_to_ptr.vmem [resolvable:$true] %s20
  %23 = dma.vmem_to_smem %s21, 16, [#allocation7], [#allocation5]
  %s24 = sshll.u32 %s2, 4
  %s25 = int_to_ptr.vmem [resolvable:$true] %s24
  %27 = dma.vmem_to_smem %s25, 16, [#allocation8], [#allocation5]
  %28 = dma.done [#allocation5], 48
  %29 = sfence
  $region1: #{tpu_custom_call.1} parent=0
    #allocation9 [shape = 'u8[65536]{0}', space=vmem, size = 0x10000, scoped, tag = 'input window, operand 4, single buffered']
    #allocation10 [shape = 's32[1]{0}', space=sflag, size = 0x4, scoped, tag = 'scoped memory for tpu_custom_call.1']
    #allocation11 [shape = 's32[1]{0}', space=sflag, size = 0x4, scoped, tag = 'scoped memory for tpu_custom_call.1']
    #allocation12 [shape = 'u8[131072]{0}', space=vmem, size = 0x20000, scoped, tag = 'input window, operand 5, single buffered']
    #allocation13 [shape = 's32[1]{0}', space=sflag, size = 0x4, scoped, tag = 'scoped memory for tpu_custom_call.1']
    #allocation14 [shape = 'u8[262144]{0}', space=vmem, size = 0x40000, scoped, tag = 'input window, operand 7, single buffered']
    #allocation15 [shape = 'u8[8192]{0}', space=vmem, size = 0x2000, scoped, tag = 'output window, operand 0, single buffered']
    #allocation16 [shape = 'u8[4096]{0}', space=vmem, size = 0x1000, scoped, tag = 'output window, operand 1, single buffered']
    #allocation17 [shape = 's32[1]{0}', space=sflag, size = 0x4, scoped, tag = 'scoped memory for tpu_custom_call.1']
    %30 = vsyncpa [#allocation10], 0
    %31 = vsyncpa [#allocation13], 0
    %32 = vsyncpa [#allocation11], 0
    %33 = vsyncpa [#allocation17], 0
    // Predicated region
    $region2: #{tpu_custom_call.1} parent=1 // pred_check
      _
    $region3: #{tpu_custom_call.1} parent=1 // pred_check_branch
      %35 = sbr.rel (0) target = $region5
    $region4: #{tpu_custom_call.1} parent=1 // pred_region
      _
    $region5: #{tpu_custom_call.1} parent=1 // pred_fallthru
      _
    // Predicated region
    $region6: #{tpu_custom_call.1} parent=1 // pred_check
      _
    $region7: #{tpu_custom_call.1} parent=1 // pred_check_branch
      %37 = sbr.rel (0) target = $region9
    $region8: #{tpu_custom_call.1} parent=1 // pred_region
      %s39 = ssub.s32 2048, 2048
      %40 = vsyncadd [#allocation10], %s39
      %s41 = sshll.u32 [#allocation9], 4
      %s42 = int_to_ptr.vmem [resolvable:$true] %s41
      %47 = dma.hbm_to_vmem [thread:$0]  %s4, 2048, %s42, [#allocation10], 128, 128, 8
    $region9: #{tpu_custom_call.1} parent=1 // pred_fallthru
      _
    // Predicated region
    $region10: #{tpu_custom_call.1} parent=1 // pred_check
      _
    $region11: #{tpu_custom_call.1} parent=1 // pred_check_branch
      %49 = sbr.rel (0) target = $region13
    $region12: #{tpu_custom_call.1} parent=1 // pred_region
      %s51 = ssub.s32 4096, 4096
      %52 = vsyncadd [#allocation13], %s51
      %s53 = sshll.u32 [#allocation12], 4
      %s54 = int_to_ptr.vmem [resolvable:$true] %s53
      %59 = dma.hbm_to_vmem [thread:$0]  %s5, 4096, %s54, [#allocation13], 128, 128, 8
    $region13: #{tpu_custom_call.1} parent=1 // pred_fallthru
      _
    // Predicated region
    $region14: #{tpu_custom_call.1} parent=1 // pred_check
      _
    $region15: #{tpu_custom_call.1} parent=1 // pred_check_branch
      %61 = sbr.rel (0) target = $region17
    $region16: #{tpu_custom_call.1} parent=1 // pred_region
      _
    $region17: #{tpu_custom_call.1} parent=1 // pred_fallthru
      _
    // Predicated region
    $region18: #{tpu_custom_call.1} parent=1 // pred_check
      _
    $region19: #{tpu_custom_call.1} parent=1 // pred_check_branch
      %63 = sbr.rel (0) target = $region21
    $region20: #{tpu_custom_call.1} parent=1 // pred_region
      %s65 = ssub.s32 8192, 8192
      %66 = vsyncadd [#allocation13], %s65
      %s67 = sshll.u32 [#allocation14], 4
      %s68 = int_to_ptr.vmem [resolvable:$true] %s67
      %73 = dma.hbm_to_vmem [thread:$0]  %s7, 8192, %s68, [#allocation13], 128, 128, 8
    $region21: #{tpu_custom_call.1} parent=1 // pred_fallthru
      _
    // Predicated region
    $region22: #{tpu_custom_call.1} parent=1 // pred_check
      _
    $region23: #{tpu_custom_call.1} parent=1 // pred_check_branch
      %75 = sbr.rel (0) target = $region25
    $region24: #{tpu_custom_call.1} parent=1 // pred_region
      _
    $region25: #{tpu_custom_call.1} parent=1 // pred_fallthru
      _
    // Predicated region
    $region26: #{tpu_custom_call.1} parent=1 // pred_check
      _
    $region27: #{tpu_custom_call.1} parent=1 // pred_check_branch
      %77 = sbr.rel (0) target = $region29
    $region28: #{tpu_custom_call.1} parent=1 // pred_region
      %78 = dma.done [#allocation10], 2048
    $region29: #{tpu_custom_call.1} parent=1 // pred_fallthru
      _
    // Predicated region
    $region30: #{tpu_custom_call.1} parent=1 // pred_check
      _
    $region31: #{tpu_custom_call.1} parent=1 // pred_check_branch
      %80 = sbr.rel (0) target = $region33
    $region32: #{tpu_custom_call.1} parent=1 // pred_region
      %81 = dma.done [#allocation13], 4096
    $region33: #{tpu_custom_call.1} parent=1 // pred_fallthru
      _
    // Predicated region
    $region34: #{tpu_custom_call.1} parent=1 // pred_check
      _
    $region35: #{tpu_custom_call.1} parent=1 // pred_check_branch
      %83 = sbr.rel (0) target = $region37
    $region36: #{tpu_custom_call.1} parent=1 // pred_region
      %84 = dma.done [#allocation13], 8192
    $region37: #{tpu_custom_call.1} parent=1 // pred_fallthru
      _
    %v85 = vld [vmem:[%s3] sm:$0xff]
    %v86 = vld [vmem:[%s3 + $0x8] sm:$0xff]
    %v87 = vlaneseq
    %v88 = vand.u32 %v87, 127
    %89 = vset.pattern.permute.xlu0 0
    %90 = vperm.xlu0 %89, %v85
    %v91 = vpop.permute.xlu0 %90
    %92 = vset.pattern.permute.xlu0 0
    %93 = vperm.xlu0 %92, %v86
    %v94 = vpop.permute.xlu0 %93
    %vm95 = vcmp.eq.s32.totalorder %v88, %v91
    %vm96 = vcmp.eq.s32.totalorder %v88, %v94
    %v97 = vsel %vm95, 1, 0
    %v98 = vsel %vm96, 1, 0
    %v99 = vcvt.s32.f32 %v97
    %v100 = vcvt.s32.f32 %v98
    %v101 = vld [vmem:[#allocation9] sm:$0xff]
    %v102 = vld [vmem:[#allocation9 + $0x8] sm:$0xff]
    %v103 = vld [vmem:[#allocation9 + $0x10] sm:$0xff]
    %v104 = vld [vmem:[#allocation9 + $0x18] sm:$0xff]
    %v105 = vld [vmem:[#allocation9 + $0x20] sm:$0xff]
    %v106 = vld [vmem:[#allocation9 + $0x28] sm:$0xff]
    %v107 = vld [vmem:[#allocation9 + $0x30] sm:$0xff]
    %v108 = vld [vmem:[#allocation9 + $0x38] sm:$0xff]
    %v109 = vld [vmem:[#allocation9 + $0x40] sm:$0xff]
    %v110 = vld [vmem:[#allocation9 + $0x48] sm:$0xff]
    %v111 = vld [vmem:[#allocation9 + $0x50] sm:$0xff]
    %v112 = vld [vmem:[#allocation9 + $0x58] sm:$0xff]
    %v113 = vld [vmem:[#allocation9 + $0x60] sm:$0xff]
    %v114 = vld [vmem:[#allocation9 + $0x68] sm:$0xff]
    %v115 = vld [vmem:[#allocation9 + $0x70] sm:$0xff]
    %v116 = vld [vmem:[#allocation9 + $0x78] sm:$0xff]
    %117 = vmatprep.subr.mxu0 0.0
    %118 = vmatpush1.msra.mxu0 %v116
    %119 = vmatprep.subr.mxu0 0.0
    %120 = vmatpush1.msra.mxu0 %v115
    %121 = vmatprep.subr.mxu0 0.0
    %122 = vmatpush1.msra.mxu0 %v114
    %123 = vmatprep.subr.mxu0 0.0
    %124 = vmatpush1.msra.mxu0 %v113
    %125 = vmatprep.subr.mxu0 0.0
    %126 = vmatpush1.msra.mxu0 %v112
    %127 = vmatprep.subr.mxu0 0.0
    %128 = vmatpush1.msra.mxu0 %v111
    %129 = vmatprep.subr.mxu0 0.0
    %130 = vmatpush1.msra.mxu0 %v110
    %131 = vmatprep.subr.mxu0 0.0
    %132 = vmatpush1.msra.mxu0 %v109
    %133 = vmatprep.subr.mxu0 0.0
    %134 = vmatpush1.msra.mxu0 %v108
    %135 = vmatprep.subr.mxu0 0.0
    %136 = vmatpush1.msra.mxu0 %v107
    %137 = vmatprep.subr.mxu0 0.0
    %138 = vmatpush1.msra.mxu0 %v106
    %139 = vmatprep.subr.mxu0 0.0
    %140 = vmatpush1.msra.mxu0 %v105
    %141 = vmatprep.subr.mxu0 0.0
    %142 = vmatpush1.msra.mxu0 %v104
    %143 = vmatprep.subr.mxu0 0.0
    %144 = vmatpush1.msra.mxu0 %v103
    %145 = vmatprep.subr.mxu0 0.0
    %146 = vmatpush1.msra.mxu0 %v102
    %147 = vmatprep.subr.mxu0 0.0
    %148 = vmatpush1.msra.mxu0 %v101
    %149 = vmatprep.subr.mxu0 0.0
    %150 = vmatpush2.msra.mxu0 0.0
    %151 = vmatprep.subr.mxu0 0.0
    %152 = vmatpush2.msra.mxu0 0.0
    %153 = vmatprep.subr.mxu0 0.0
    %154 = vmatpush2.msra.mxu0 0.0
    %155 = vmatprep.subr.mxu0 0.0
    %156 = vmatpush2.msra.mxu0 0.0
    %157 = vmatprep.subr.mxu0 0.0
    %158 = vmatpush2.msra.mxu0 0.0
    %159 = vmatprep.subr.mxu0 0.0
    %160 = vmatpush2.msra.mxu0 0.0
    %161 = vmatprep.subr.mxu0 0.0
    %162 = vmatpush2.msra.mxu0 0.0
    %163 = vmatprep.subr.mxu0 0.0
    %164 = vmatpush2.msra.mxu0 0.0
    %165 = vmatprep.subr.mxu0 0.0
    %166 = vmatpush2.msra.mxu0 0.0
    %167 = vmatprep.subr.mxu0 0.0
    %168 = vmatpush2.msra.mxu0 0.0
    %169 = vmatprep.subr.mxu0 0.0
    %170 = vmatpush2.msra.mxu0 0.0
    %171 = vmatprep.subr.mxu0 0.0
    %172 = vmatpush2.msra.mxu0 0.0
    %173 = vmatprep.subr.mxu0 0.0
    %174 = vmatpush2.msra.mxu0 0.0
    %175 = vmatprep.subr.mxu0 0.0
    %176 = vmatpush2.msra.mxu0 0.0
    %177 = vmatprep.subr.mxu0 0.0
    %178 = vmatpush2.msra.mxu0 0.0
    %179 = vmatprep.subr.mxu0 0.0
    %180 = vmatpush2.msra.mxu0 0.0
    %181 = vmatprep.mubr.f32.mxu0 0.0
    %182 = vmatmul.mubr.f32.gmra.mxu0 %v99
    %v183 = vpop.f32.mrf.mxu0
    %v184 = vadd.f32 0.0, %v183
    %v185 = vpop.f32.mrf.mxu0
    %186 = vmatprep.mubr.f32.mxu0 0.0
    %187 = vmatmul.mubr.f32.gmra.mxu0 %v100
    %v188 = vpop.f32.mrf.mxu0
    %v189 = vadd.f32 0.0, %v188
    %v190 = vpop.f32.mrf.mxu0
    %191 = vdwg.mxu0
    %v192 = vld [vmem:[#allocation12] sm:$0xff]
    %v193 = vld [vmem:[#allocation12 + $0x8] sm:$0xff]
    %v194 = vld [vmem:[#allocation12 + $0x10] sm:$0xff]
    %v195 = vld [vmem:[#allocation12 + $0x18] sm:$0xff]
    %v196 = vld [vmem:[#allocation12 + $0x20] sm:$0xff]
    %v197 = vld [vmem:[#allocation12 + $0x28] sm:$0xff]
    %v198 = vld [vmem:[#allocation12 + $0x30] sm:$0xff]
    %v199 = vld [vmem:[#allocation12 + $0x38] sm:$0xff]
    %v200 = vld [vmem:[#allocation12 + $0x40] sm:$0xff]
    %v201 = vld [vmem:[#allocation12 + $0x48] sm:$0xff]
    %v202 = vld [vmem:[#allocation12 + $0x50] sm:$0xff]
    %v203 = vld [vmem:[#allocation12 + $0x58] sm:$0xff]
    %v204 = vld [vmem:[#allocation12 + $0x60] sm:$0xff]
    %v205 = vld [vmem:[#allocation12 + $0x68] sm:$0xff]
    %v206 = vld [vmem:[#allocation12 + $0x70] sm:$0xff]
    %v207 = vld [vmem:[#allocation12 + $0x78] sm:$0xff]
    %v208 = vld [vmem:[%s6] sm:$0x1]
    %v210 = vlaneseq
    %v211 = vshrl.u32 %v210, 7
    %v212 = vsub.s32 0, %v211
    %v213 = vrot.slane %v208, %v212
    %215 = vmatprep.subr.mxu0 0.0
    %216 = vmatpush1.msra.mxu0 %v207
    %217 = vmatprep.subr.mxu0 0.0
    %218 = vmatpush1.msra.mxu0 %v206
    %219 = vmatprep.subr.mxu0 0.0
    %220 = vmatpush1.msra.mxu0 %v205
    %221 = vmatprep.subr.mxu0 0.0
    %222 = vmatpush1.msra.mxu0 %v204
    %223 = vmatprep.subr.mxu0 0.0
    %224 = vmatpush1.msra.mxu0 %v203
    %225 = vmatprep.subr.mxu0 0.0
    %226 = vmatpush1.msra.mxu0 %v202
    %227 = vmatprep.subr.mxu0 0.0
    %228 = vmatpush1.msra.mxu0 %v201
    %229 = vmatprep.subr.mxu0 0.0
    %230 = vmatpush1.msra.mxu0 %v200
    %231 = vmatprep.subr.mxu0 0.0
    %232 = vmatpush1.msra.mxu0 %v199
    %233 = vmatprep.subr.mxu0 0.0
    %234 = vmatpush1.msra.mxu0 %v198
    %235 = vmatprep.subr.mxu0 0.0
    %236 = vmatpush1.msra.mxu0 %v197
    %237 = vmatprep.subr.mxu0 0.0
    %238 = vmatpush1.msra.mxu0 %v196
    %239 = vmatprep.subr.mxu0 0.0
    %240 = vmatpush1.msra.mxu0 %v195
    %241 = vmatprep.subr.mxu0 0.0
    %242 = vmatpush1.msra.mxu0 %v194
    %243 = vmatprep.subr.mxu0 0.0
    %244 = vmatpush1.msra.mxu0 %v193
    %245 = vmatprep.subr.mxu0 0.0
    %246 = vmatpush1.msra.mxu0 %v192
    %247 = vmatprep.subr.mxu0 0.0
    %248 = vmatpush2.msra.mxu0 0.0
    %249 = vmatprep.subr.mxu0 0.0
    %250 = vmatpush2.msra.mxu0 0.0
    %251 = vmatprep.subr.mxu0 0.0
    %252 = vmatpush2.msra.mxu0 0.0
    %253 = vmatprep.subr.mxu0 0.0
    %254 = vmatpush2.msra.mxu0 0.0
    %255 = vmatprep.subr.mxu0 0.0
    %256 = vmatpush2.msra.mxu0 0.0
    %257 = vmatprep.subr.mxu0 0.0
    %258 = vmatpush2.msra.mxu0 0.0
    %259 = vmatprep.subr.mxu0 0.0
    %260 = vmatpush2.msra.mxu0 0.0
    %261 = vmatprep.subr.mxu0 0.0
    %262 = vmatpush2.msra.mxu0 0.0
    %263 = vmatprep.subr.mxu0 0.0
    %264 = vmatpush2.msra.mxu0 0.0
    %265 = vmatprep.subr.mxu0 0.0
    %266 = vmatpush2.msra.mxu0 0.0
    %267 = vmatprep.subr.mxu0 0.0
    %268 = vmatpush2.msra.mxu0 0.0
    %269 = vmatprep.subr.mxu0 0.0
    %270 = vmatpush2.msra.mxu0 0.0
    %271 = vmatprep.subr.mxu0 0.0
    %272 = vmatpush2.msra.mxu0 0.0
    %273 = vmatprep.subr.mxu0 0.0
    %274 = vmatpush2.msra.mxu0 0.0
    %275 = vmatprep.subr.mxu0 0.0
    %276 = vmatpush2.msra.mxu0 0.0
    %277 = vmatprep.subr.mxu0 0.0
    %278 = vmatpush2.msra.mxu0 0.0
    %279 = vmatprep.mubr.f32.mxu0 0.0
    %280 = vmatmul.mubr.f32.gmra.mxu0 %v184
    %v281 = vpop.f32.mrf.mxu0
    %v282 = vadd.f32 %v213, %v281
    %v283 = vpop.f32.mrf.mxu0
    %284 = vmatprep.mubr.f32.mxu0 0.0
    %285 = vmatmul.mubr.f32.gmra.mxu0 %v189
    %v286 = vpop.f32.mrf.mxu0
    %v287 = vadd.f32 %v213, %v286
    %v288 = vpop.f32.mrf.mxu0
    %289 = vdwg.mxu0
    %v290 = vtanh.pop %v282
    %v291 = vtanh.pop %v287
    %s292 = scalar_lea.vmem [#allocation12], 128
    %v293 = vld [vmem:[%s292] sm:$0xff]
    %v294 = vld [vmem:[%s292 + $0x8] sm:$0xff]
    %v295 = vld [vmem:[%s292 + $0x10] sm:$0xff]
    %v296 = vld [vmem:[%s292 + $0x18] sm:$0xff]
    %v297 = vld [vmem:[%s292 + $0x20] sm:$0xff]
    %v298 = vld [vmem:[%s292 + $0x28] sm:$0xff]
    %v299 = vld [vmem:[%s292 + $0x30] sm:$0xff]
    %v300 = vld [vmem:[%s292 + $0x38] sm:$0xff]
    %v301 = vld [vmem:[%s292 + $0x40] sm:$0xff]
    %v302 = vld [vmem:[%s292 + $0x48] sm:$0xff]
    %v303 = vld [vmem:[%s292 + $0x50] sm:$0xff]
    %v304 = vld [vmem:[%s292 + $0x58] sm:$0xff]
    %v305 = vld [vmem:[%s292 + $0x60] sm:$0xff]
    %v306 = vld [vmem:[%s292 + $0x68] sm:$0xff]
    %v307 = vld [vmem:[%s292 + $0x70] sm:$0xff]
    %v308 = vld [vmem:[%s292 + $0x78] sm:$0xff]
    %s309 = scalar_lea.vmem %s6, 1
    %v310 = vld [vmem:[%s309] sm:$0x1]
    %v312 = vlaneseq
    %v313 = vshrl.u32 %v312, 7
    %v314 = vsub.s32 0, %v313
    %v315 = vrot.slane %v310, %v314
    %317 = vmatprep.subr.mxu0 0.0
    %318 = vmatpush1.msra.mxu0 %v308
    %319 = vmatprep.subr.mxu0 0.0
    %320 = vmatpush1.msra.mxu0 %v307
    %321 = vmatprep.subr.mxu0 0.0
    %322 = vmatpush1.msra.mxu0 %v306
    %323 = vmatprep.subr.mxu0 0.0
    %324 = vmatpush1.msra.mxu0 %v305
    %325 = vmatprep.subr.mxu0 0.0
    %326 = vmatpush1.msra.mxu0 %v304
    %327 = vmatprep.subr.mxu0 0.0
    %328 = vmatpush1.msra.mxu0 %v303
    %329 = vmatprep.subr.mxu0 0.0
    %330 = vmatpush1.msra.mxu0 %v302
    %331 = vmatprep.subr.mxu0 0.0
    %332 = vmatpush1.msra.mxu0 %v301
    %333 = vmatprep.subr.mxu0 0.0
    %334 = vmatpush1.msra.mxu0 %v300
    %335 = vmatprep.subr.mxu0 0.0
    %336 = vmatpush1.msra.mxu0 %v299
    %337 = vmatprep.subr.mxu0 0.0
    %338 = vmatpush1.msra.mxu0 %v298
    %339 = vmatprep.subr.mxu0 0.0
    %340 = vmatpush1.msra.mxu0 %v297
    %341 = vmatprep.subr.mxu0 0.0
    %342 = vmatpush1.msra.mxu0 %v296
    %343 = vmatprep.subr.mxu0 0.0
    %344 = vmatpush1.msra.mxu0 %v295
    %345 = vmatprep.subr.mxu0 0.0
    %346 = vmatpush1.msra.mxu0 %v294
    %347 = vmatprep.subr.mxu0 0.0
    %348 = vmatpush1.msra.mxu0 %v293
    %349 = vmatprep.subr.mxu0 0.0
    %350 = vmatpush2.msra.mxu0 0.0
    %351 = vmatprep.subr.mxu0 0.0
    %352 = vmatpush2.msra.mxu0 0.0
    %353 = vmatprep.subr.mxu0 0.0
    %354 = vmatpush2.msra.mxu0 0.0
    %355 = vmatprep.subr.mxu0 0.0
    %356 = vmatpush2.msra.mxu0 0.0
    %357 = vmatprep.subr.mxu0 0.0
    %358 = vmatpush2.msra.mxu0 0.0
    %359 = vmatprep.subr.mxu0 0.0
    %360 = vmatpush2.msra.mxu0 0.0
    %361 = vmatprep.subr.mxu0 0.0
    %362 = vmatpush2.msra.mxu0 0.0
    %363 = vmatprep.subr.mxu0 0.0
    %364 = vmatpush2.msra.mxu0 0.0
    %365 = vmatprep.subr.mxu0 0.0
    %366 = vmatpush2.msra.mxu0 0.0
    %367 = vmatprep.subr.mxu0 0.0
    %368 = vmatpush2.msra.mxu0 0.0
    %369 = vmatprep.subr.mxu0 0.0
    %370 = vmatpush2.msra.mxu0 0.0
    %371 = vmatprep.subr.mxu0 0.0
    %372 = vmatpush2.msra.mxu0 0.0
    %373 = vmatprep.subr.mxu0 0.0
    %374 = vmatpush2.msra.mxu0 0.0
    %375 = vmatprep.subr.mxu0 0.0
    %376 = vmatpush2.msra.mxu0 0.0
    %377 = vmatprep.subr.mxu0 0.0
    %378 = vmatpush2.msra.mxu0 0.0
    %379 = vmatprep.subr.mxu0 0.0
    %380 = vmatpush2.msra.mxu0 0.0
    %381 = vmatprep.mubr.f32.mxu0 0.0
    %382 = vmatmul.mubr.f32.gmra.mxu0 %v290
    %v383 = vpop.f32.mrf.mxu0
    %v384 = vadd.f32 %v315, %v383
    %v385 = vpop.f32.mrf.mxu0
    %386 = vmatprep.mubr.f32.mxu0 0.0
    %387 = vmatmul.mubr.f32.gmra.mxu0 %v291
    %v388 = vpop.f32.mrf.mxu0
    %v389 = vadd.f32 %v315, %v388
    %v390 = vpop.f32.mrf.mxu0
    %391 = vdwg.mxu0
    %v392 = vtanh.pop %v384
    %v393 = vtanh.pop %v389
    %394 = vst [vmem:[#allocation15] sm:$0xff] %v392
    %395 = vst [vmem:[#allocation15 + $0x8] sm:$0xff] %v393
    %v396 = vld [vmem:[#allocation14] sm:$0xff]
    %v397 = vld [vmem:[#allocation14 + $0x8] sm:$0xff]
    %v398 = vld [vmem:[#allocation14 + $0x10] sm:$0xff]
    %v399 = vld [vmem:[#allocation14 + $0x18] sm:$0xff]
    %v400 = vld [vmem:[#allocation14 + $0x20] sm:$0xff]
    %v401 = vld [vmem:[#allocation14 + $0x28] sm:$0xff]
    %v402 = vld [vmem:[#allocation14 + $0x30] sm:$0xff]
    %v403 = vld [vmem:[#allocation14 + $0x38] sm:$0xff]
    %v404 = vld [vmem:[#allocation14 + $0x40] sm:$0xff]
    %v405 = vld [vmem:[#allocation14 + $0x48] sm:$0xff]
    %v406 = vld [vmem:[#allocation14 + $0x50] sm:$0xff]
    %v407 = vld [vmem:[#allocation14 + $0x58] sm:$0xff]
    %v408 = vld [vmem:[#allocation14 + $0x60] sm:$0xff]
    %v409 = vld [vmem:[#allocation14 + $0x68] sm:$0xff]
    %v410 = vld [vmem:[#allocation14 + $0x70] sm:$0xff]
    %v411 = vld [vmem:[#allocation14 + $0x78] sm:$0xff]
    %412 = vmatprep.subr.mxu0 0.0
    %413 = vmatpush1.msra.mxu0 %v411
    %414 = vmatprep.subr.mxu0 0.0
    %415 = vmatpush1.msra.mxu0 %v410
    %416 = vmatprep.subr.mxu0 0.0
    %417 = vmatpush1.msra.mxu0 %v409
    %418 = vmatprep.subr.mxu0 0.0
    %419 = vmatpush1.msra.mxu0 %v408
    %420 = vmatprep.subr.mxu0 0.0
    %421 = vmatpush1.msra.mxu0 %v407
    %422 = vmatprep.subr.mxu0 0.0
    %423 = vmatpush1.msra.mxu0 %v406
    %424 = vmatprep.subr.mxu0 0.0
    %425 = vmatpush1.msra.mxu0 %v405
    %426 = vmatprep.subr.mxu0 0.0
    %427 = vmatpush1.msra.mxu0 %v404
    %428 = vmatprep.subr.mxu0 0.0
    %429 = vmatpush1.msra.mxu0 %v403
    %430 = vmatprep.subr.mxu0 0.0
    %431 = vmatpush1.msra.mxu0 %v402
    %432 = vmatprep.subr.mxu0 0.0
    %433 = vmatpush1.msra.mxu0 %v401
    %434 = vmatprep.subr.mxu0 0.0
    %435 = vmatpush1.msra.mxu0 %v400
    %436 = vmatprep.subr.mxu0 0.0
    %437 = vmatpush1.msra.mxu0 %v399
    %438 = vmatprep.subr.mxu0 0.0
    %439 = vmatpush1.msra.mxu0 %v398
    %440 = vmatprep.subr.mxu0 0.0
    %441 = vmatpush1.msra.mxu0 %v397
    %442 = vmatprep.subr.mxu0 0.0
    %443 = vmatpush1.msra.mxu0 %v396
    %444 = vmatprep.subr.mxu0 0.0
    %445 = vmatpush2.msra.mxu0 0.0
    %446 = vmatprep.subr.mxu0 0.0
    %447 = vmatpush2.msra.mxu0 0.0
    %448 = vmatprep.subr.mxu0 0.0
    %449 = vmatpush2.msra.mxu0 0.0
    %450 = vmatprep.subr.mxu0 0.0
    %451 = vmatpush2.msra.mxu0 0.0
    %452 = vmatprep.subr.mxu0 0.0
    %453 = vmatpush2.msra.mxu0 0.0
    %454 = vmatprep.subr.mxu0 0.0
    %455 = vmatpush2.msra.mxu0 0.0
    %456 = vmatprep.subr.mxu0 0.0
    %457 = vmatpush2.msra.mxu0 0.0
    %458 = vmatprep.subr.mxu0 0.0
    %459 = vmatpush2.msra.mxu0 0.0
    %460 = vmatprep.subr.mxu0 0.0
    %461 = vmatpush2.msra.mxu0 0.0
    %462 = vmatprep.subr.mxu0 0.0
    %463 = vmatpush2.msra.mxu0 0.0
    %464 = vmatprep.subr.mxu0 0.0
    %465 = vmatpush2.msra.mxu0 0.0
    %466 = vmatprep.subr.mxu0 0.0
    %467 = vmatpush2.msra.mxu0 0.0
    %468 = vmatprep.subr.mxu0 0.0
    %469 = vmatpush2.msra.mxu0 0.0
    %470 = vmatprep.subr.mxu0 0.0
    %471 = vmatpush2.msra.mxu0 0.0
    %472 = vmatprep.subr.mxu0 0.0
    %473 = vmatpush2.msra.mxu0 0.0
    %474 = vmatprep.subr.mxu0 0.0
    %475 = vmatpush2.msra.mxu0 0.0
    %476 = vmatprep.mubr.f32.mxu0 0.0
    %477 = vmatmul.mubr.f32.gmra.mxu0 %v392
    %v478 = vpop.f32.mrf.mxu0
    %v479 = vadd.f32 0.0, %v478
    %v480 = vpop.f32.mrf.mxu0
    %481 = vmatprep.mubr.f32.mxu0 0.0
    %482 = vmatmul.mubr.f32.gmra.mxu0 %v393
    %v483 = vpop.f32.mrf.mxu0
    %v484 = vadd.f32 0.0, %v483
    %v485 = vpop.f32.mrf.mxu0
    %486 = vdwg.mxu0
    %487 = vst [vmem:[#allocation2] sm:$0xff] %v479
    %488 = vst [vmem:[#allocation2 + $0x8] sm:$0xff] %v484
    %489 = vst [vmem:[#allocation16] sm:$0xff] 0.0
    %490 = vst [vmem:[#allocation3] sm:$0xff] 0.0
    %491 = vst [vmem:[#allocation4] sm:$0xff] 0.0
    %v492 = vld [vmem:[%s8] sm:$0x1]
    %s493 = scalar_lea.vmem %s8, 1
    %v494 = vld [vmem:[%s493] sm:$0x1]
    %s495 = scalar_lea.vmem %s8, 2
    %v496 = vld [vmem:[%s495] sm:$0x1]
    %s497 = scalar_lea.vmem %s8, 3
    %v498 = vld [vmem:[%s497] sm:$0x1]
    %v499 = vlaneseq
    %v500 = vshrl.u32 %v499, 7
    %vm501 = vcmp.lt.s32.totalorder %v88, 32
    loop: start=0, step=1, limit=2
    $region38: #{tpu_custom_call.1} parent=1 // loop_pre_header
      _
    $region39: #{tpu_custom_call.1} parent=1 // loop_header
      %s503 = sphi 0, %s507
      %p504 = scmp.ge.s32.totalorder %s503, 2
    $region40: #{tpu_custom_call.1} parent=1 // loop_header_branch
      %506 = sbr.rel (%p504) target = $region44
    $region41: #{tpu_custom_call.1} parent=1 // loop_body
      %s508 = sld [smem:[#allocation6 + %s503]]
      %s509 = sld [smem:[#allocation7 + %s503]]
      %s510 = sld [smem:[#allocation8 + %s503]]
      %s511 = scalar_lea.vmem [#allocation2], %s508
      %v512 = vld [vmem:[%s511] sm:$0xff]
      %v513 = vstv %s509
      %vm514 = vcmp.lt.s32.totalorder %v500, %v513
      %v515 = vsel %vm514, 1, 0
      %vm516 = vcmp.eq.s32.totalorder %v515, 1
      %v517 = vsel %vm516, %v512, 0.0
      %v519 = vlaneseq
      %v520 = vshrl.u32 %v519, 7
      %v521 = vsub.s32 0, %v520
      %v522 = vrot.slane %v492, %v521
      %v524 = vadd.f32 %v517, %v522
      %v525 = vld [vmem:[#allocation3] sm:$0xff]
      %v526 = vld [vmem:[#allocation4] sm:$0xff]
      %s527 = scalar_lea.vmem [#allocation14], 128
      %v528 = vld [vmem:[%s527] sm:$0xff]
      %v529 = vld [vmem:[%s527 + $0x8] sm:$0xff]
      %v530 = vld [vmem:[%s527 + $0x10] sm:$0xff]
      %v531 = vld [vmem:[%s527 + $0x18] sm:$0xff]
      %v532 = vld [vmem:[%s527 + $0x20] sm:$0xff]
      %v533 = vld [vmem:[%s527 + $0x28] sm:$0xff]
      %v534 = vld [vmem:[%s527 + $0x30] sm:$0xff]
      %v535 = vld [vmem:[%s527 + $0x38] sm:$0xff]
      %v536 = vld [vmem:[%s527 + $0x40] sm:$0xff]
      %v537 = vld [vmem:[%s527 + $0x48] sm:$0xff]
      %v538 = vld [vmem:[%s527 + $0x50] sm:$0xff]
      %v539 = vld [vmem:[%s527 + $0x58] sm:$0xff]
      %v540 = vld [vmem:[%s527 + $0x60] sm:$0xff]
      %v541 = vld [vmem:[%s527 + $0x68] sm:$0xff]
      %v542 = vld [vmem:[%s527 + $0x70] sm:$0xff]
      %v543 = vld [vmem:[%s527 + $0x78] sm:$0xff]
      %v545 = vlaneseq
      %v546 = vshrl.u32 %v545, 7
      %v547 = vsub.s32 0, %v546
      %v548 = vrot.slane %v494, %v547
      %550 = vmatprep.subr.mxu0 0.0
      %551 = vmatpush1.msra.mxu0 %v543
      %552 = vmatprep.subr.mxu0 0.0
      %553 = vmatpush1.msra.mxu0 %v542
      %554 = vmatprep.subr.mxu0 0.0
      %555 = vmatpush1.msra.mxu0 %v541
      %556 = vmatprep.subr.mxu0 0.0
      %557 = vmatpush1.msra.mxu0 %v540
      %558 = vmatprep.subr.mxu0 0.0
      %559 = vmatpush1.msra.mxu0 %v539
      %560 = vmatprep.subr.mxu0 0.0
      %561 = vmatpush1.msra.mxu0 %v538
      %562 = vmatprep.subr.mxu0 0.0
      %563 = vmatpush1.msra.mxu0 %v537
      %564 = vmatprep.subr.mxu0 0.0
      %565 = vmatpush1.msra.mxu0 %v536
      %566 = vmatprep.subr.mxu0 0.0
      %567 = vmatpush1.msra.mxu0 %v535
      %568 = vmatprep.subr.mxu0 0.0
      %569 = vmatpush1.msra.mxu0 %v534
      %570 = vmatprep.subr.mxu0 0.0
      %571 = vmatpush1.msra.mxu0 %v533
      %572 = vmatprep.subr.mxu0 0.0
      %573 = vmatpush1.msra.mxu0 %v532
      %574 = vmatprep.subr.mxu0 0.0
      %575 = vmatpush1.msra.mxu0 %v531
      %576 = vmatprep.subr.mxu0 0.0
      %577 = vmatpush1.msra.mxu0 %v530
      %578 = vmatprep.subr.mxu0 0.0
      %579 = vmatpush1.msra.mxu0 %v529
      %580 = vmatprep.subr.mxu0 0.0
      %581 = vmatpush1.msra.mxu0 %v528
      %582 = vmatprep.subr.mxu0 0.0
      %583 = vmatpush2.msra.mxu0 0.0
      %584 = vmatprep.subr.mxu0 0.0
      %585 = vmatpush2.msra.mxu0 0.0
      %586 = vmatprep.subr.mxu0 0.0
      %587 = vmatpush2.msra.mxu0 0.0
      %588 = vmatprep.subr.mxu0 0.0
      %589 = vmatpush2.msra.mxu0 0.0
      %590 = vmatprep.subr.mxu0 0.0
      %591 = vmatpush2.msra.mxu0 0.0
      %592 = vmatprep.subr.mxu0 0.0
      %593 = vmatpush2.msra.mxu0 0.0
      %594 = vmatprep.subr.mxu0 0.0
      %595 = vmatpush2.msra.mxu0 0.0
      %596 = vmatprep.subr.mxu0 0.0
      %597 = vmatpush2.msra.mxu0 0.0
      %598 = vmatprep.subr.mxu0 0.0
      %599 = vmatpush2.msra.mxu0 0.0
      %600 = vmatprep.subr.mxu0 0.0
      %601 = vmatpush2.msra.mxu0 0.0
      %602 = vmatprep.subr.mxu0 0.0
      %603 = vmatpush2.msra.mxu0 0.0
      %604 = vmatprep.subr.mxu0 0.0
      %605 = vmatpush2.msra.mxu0 0.0
      %606 = vmatprep.subr.mxu0 0.0
      %607 = vmatpush2.msra.mxu0 0.0
      %608 = vmatprep.subr.mxu0 0.0
      %609 = vmatpush2.msra.mxu0 0.0
      %610 = vmatprep.subr.mxu0 0.0
      %611 = vmatpush2.msra.mxu0 0.0
      %612 = vmatprep.subr.mxu0 0.0
      %613 = vmatpush2.msra.mxu0 0.0
      %614 = vmatprep.mubr.f32.mxu0 0.0
      %615 = vmatmul.mubr.f32.gmra.mxu0 %v525
      %v616 = vpop.f32.mrf.mxu0
      %v617 = vadd.f32 %v548, %v616
      %v618 = vpop.f32.mrf.mxu0
      %619 = vdwg.mxu0
      %v620 = vadd.f32 %v524, %v617
      %v621 = vxor.u32 %v620, 2147483648
      %v622 = vmul.f32 %v621, 1.442695
      %v623 = vpow.pop %v622
      %v624 = vadd.f32 %v623, 1.0
      %v625 = vrcp.pop %v624
      %v626 = vmul.f32 1.0, %v625
      %627 = vrot.lane.b32.xlu0 %v626, 96
      %v628 = vpop.permute.xlu0 %627
      %v629 = vmul.f32 %v628, %v617
      %v630 = vadd.f32 %v524, %v629
      %v631 = vtanh.pop %v630
      %632 = vrot.lane.b32.xlu0 %v626, 64
      %v633 = vpop.permute.xlu0 %632
      %v634 = vsub.f32 1.0, %v633
      %v635 = vmul.f32 %v634, %v631
      %v636 = vmul.f32 %v633, %v525
      %v637 = vadd.f32 %v635, %v636
      %v638 = vsel %vm501, %v637, 0.0
      %s639 = scalar_lea.vmem [#allocation14], 256
      %v640 = vld [vmem:[%s639] sm:$0xff]
      %v641 = vld [vmem:[%s639 + $0x8] sm:$0xff]
      %v642 = vld [vmem:[%s639 + $0x10] sm:$0xff]
      %v643 = vld [vmem:[%s639 + $0x18] sm:$0xff]
      %v644 = vld [vmem:[%s639 + $0x20] sm:$0xff]
      %v645 = vld [vmem:[%s639 + $0x28] sm:$0xff]
      %v646 = vld [vmem:[%s639 + $0x30] sm:$0xff]
      %v647 = vld [vmem:[%s639 + $0x38] sm:$0xff]
      %v648 = vld [vmem:[%s639 + $0x40] sm:$0xff]
      %v649 = vld [vmem:[%s639 + $0x48] sm:$0xff]
      %v650 = vld [vmem:[%s639 + $0x50] sm:$0xff]
      %v651 = vld [vmem:[%s639 + $0x58] sm:$0xff]
      %v652 = vld [vmem:[%s639 + $0x60] sm:$0xff]
      %v653 = vld [vmem:[%s639 + $0x68] sm:$0xff]
      %v654 = vld [vmem:[%s639 + $0x70] sm:$0xff]
      %v655 = vld [vmem:[%s639 + $0x78] sm:$0xff]
      %v657 = vlaneseq
      %v658 = vshrl.u32 %v657, 7
      %v659 = vsub.s32 0, %v658
      %v660 = vrot.slane %v496, %v659
      %662 = vmatprep.subr.mxu0 0.0
      %663 = vmatpush1.msra.mxu0 %v655
      %664 = vmatprep.subr.mxu0 0.0
      %665 = vmatpush1.msra.mxu0 %v654
      %666 = vmatprep.subr.mxu0 0.0
      %667 = vmatpush1.msra.mxu0 %v653
      %668 = vmatprep.subr.mxu0 0.0
      %669 = vmatpush1.msra.mxu0 %v652
      %670 = vmatprep.subr.mxu0 0.0
      %671 = vmatpush1.msra.mxu0 %v651
      %672 = vmatprep.subr.mxu0 0.0
      %673 = vmatpush1.msra.mxu0 %v650
      %674 = vmatprep.subr.mxu0 0.0
      %675 = vmatpush1.msra.mxu0 %v649
      %676 = vmatprep.subr.mxu0 0.0
      %677 = vmatpush1.msra.mxu0 %v648
      %678 = vmatprep.subr.mxu0 0.0
      %679 = vmatpush1.msra.mxu0 %v647
      %680 = vmatprep.subr.mxu0 0.0
      %681 = vmatpush1.msra.mxu0 %v646
      %682 = vmatprep.subr.mxu0 0.0
      %683 = vmatpush1.msra.mxu0 %v645
      %684 = vmatprep.subr.mxu0 0.0
      %685 = vmatpush1.msra.mxu0 %v644
      %686 = vmatprep.subr.mxu0 0.0
      %687 = vmatpush1.msra.mxu0 %v643
      %688 = vmatprep.subr.mxu0 0.0
      %689 = vmatpush1.msra.mxu0 %v642
      %690 = vmatprep.subr.mxu0 0.0
      %691 = vmatpush1.msra.mxu0 %v641
      %692 = vmatprep.subr.mxu0 0.0
      %693 = vmatpush1.msra.mxu0 %v640
      %694 = vmatprep.subr.mxu0 0.0
      %695 = vmatpush2.msra.mxu0 0.0
      %696 = vmatprep.subr.mxu0 0.0
      %697 = vmatpush2.msra.mxu0 0.0
      %698 = vmatprep.subr.mxu0 0.0
      %699 = vmatpush2.msra.mxu0 0.0
      %700 = vmatprep.subr.mxu0 0.0
      %701 = vmatpush2.msra.mxu0 0.0
      %702 = vmatprep.subr.mxu0 0.0
      %703 = vmatpush2.msra.mxu0 0.0
      %704 = vmatprep.subr.mxu0 0.0
      %705 = vmatpush2.msra.mxu0 0.0
      %706 = vmatprep.subr.mxu0 0.0
      %707 = vmatpush2.msra.mxu0 0.0
      %708 = vmatprep.subr.mxu0 0.0
      %709 = vmatpush2.msra.mxu0 0.0
      %710 = vmatprep.subr.mxu0 0.0
      %711 = vmatpush2.msra.mxu0 0.0
      %712 = vmatprep.subr.mxu0 0.0
      %713 = vmatpush2.msra.mxu0 0.0
      %714 = vmatprep.subr.mxu0 0.0
      %715 = vmatpush2.msra.mxu0 0.0
      %716 = vmatprep.subr.mxu0 0.0
      %717 = vmatpush2.msra.mxu0 0.0
      %718 = vmatprep.subr.mxu0 0.0
      %719 = vmatpush2.msra.mxu0 0.0
      %720 = vmatprep.subr.mxu0 0.0
      %721 = vmatpush2.msra.mxu0 0.0
      %722 = vmatprep.subr.mxu0 0.0
      %723 = vmatpush2.msra.mxu0 0.0
      %724 = vmatprep.subr.mxu0 0.0
      %725 = vmatpush2.msra.mxu0 0.0
      %726 = vmatprep.mubr.f32.mxu0 0.0
      %727 = vmatmul.mubr.f32.gmra.mxu0 %v638
      %v728 = vpop.f32.mrf.mxu0
      %v729 = vadd.f32 %v660, %v728
      %v730 = vpop.f32.mrf.mxu0
      %731 = vdwg.mxu0
      %s732 = scalar_lea.vmem [#allocation14], 384
      %v733 = vld [vmem:[%s732] sm:$0xff]
      %v734 = vld [vmem:[%s732 + $0x8] sm:$0xff]
      %v735 = vld [vmem:[%s732 + $0x10] sm:$0xff]
      %v736 = vld [vmem:[%s732 + $0x18] sm:$0xff]
      %v737 = vld [vmem:[%s732 + $0x20] sm:$0xff]
      %v738 = vld [vmem:[%s732 + $0x28] sm:$0xff]
      %v739 = vld [vmem:[%s732 + $0x30] sm:$0xff]
      %v740 = vld [vmem:[%s732 + $0x38] sm:$0xff]
      %v741 = vld [vmem:[%s732 + $0x40] sm:$0xff]
      %v742 = vld [vmem:[%s732 + $0x48] sm:$0xff]
      %v743 = vld [vmem:[%s732 + $0x50] sm:$0xff]
      %v744 = vld [vmem:[%s732 + $0x58] sm:$0xff]
      %v745 = vld [vmem:[%s732 + $0x60] sm:$0xff]
      %v746 = vld [vmem:[%s732 + $0x68] sm:$0xff]
      %v747 = vld [vmem:[%s732 + $0x70] sm:$0xff]
      %v748 = vld [vmem:[%s732 + $0x78] sm:$0xff]
      %v750 = vlaneseq
      %v751 = vshrl.u32 %v750, 7
      %v752 = vsub.s32 0, %v751
      %v753 = vrot.slane %v498, %v752
      %755 = vmatprep.subr.mxu0 0.0
      %756 = vmatpush1.msra.mxu0 %v748
      %757 = vmatprep.subr.mxu0 0.0
      %758 = vmatpush1.msra.mxu0 %v747
      %759 = vmatprep.subr.mxu0 0.0
      %760 = vmatpush1.msra.mxu0 %v746
      %761 = vmatprep.subr.mxu0 0.0
      %762 = vmatpush1.msra.mxu0 %v745
      %763 = vmatprep.subr.mxu0 0.0
      %764 = vmatpush1.msra.mxu0 %v744
      %765 = vmatprep.subr.mxu0 0.0
      %766 = vmatpush1.msra.mxu0 %v743
      %767 = vmatprep.subr.mxu0 0.0
      %768 = vmatpush1.msra.mxu0 %v742
      %769 = vmatprep.subr.mxu0 0.0
      %770 = vmatpush1.msra.mxu0 %v741
      %771 = vmatprep.subr.mxu0 0.0
      %772 = vmatpush1.msra.mxu0 %v740
      %773 = vmatprep.subr.mxu0 0.0
      %774 = vmatpush1.msra.mxu0 %v739
      %775 = vmatprep.subr.mxu0 0.0
      %776 = vmatpush1.msra.mxu0 %v738
      %777 = vmatprep.subr.mxu0 0.0
      %778 = vmatpush1.msra.mxu0 %v737
      %779 = vmatprep.subr.mxu0 0.0
      %780 = vmatpush1.msra.mxu0 %v736
      %781 = vmatprep.subr.mxu0 0.0
      %782 = vmatpush1.msra.mxu0 %v735
      %783 = vmatprep.subr.mxu0 0.0
      %784 = vmatpush1.msra.mxu0 %v734
      %785 = vmatprep.subr.mxu0 0.0
      %786 = vmatpush1.msra.mxu0 %v733
      %787 = vmatprep.subr.mxu0 0.0
      %788 = vmatpush2.msra.mxu0 0.0
      %789 = vmatprep.subr.mxu0 0.0
      %790 = vmatpush2.msra.mxu0 0.0
      %791 = vmatprep.subr.mxu0 0.0
      %792 = vmatpush2.msra.mxu0 0.0
      %793 = vmatprep.subr.mxu0 0.0
      %794 = vmatpush2.msra.mxu0 0.0
      %795 = vmatprep.subr.mxu0 0.0
      %796 = vmatpush2.msra.mxu0 0.0
      %797 = vmatprep.subr.mxu0 0.0
      %798 = vmatpush2.msra.mxu0 0.0
      %799 = vmatprep.subr.mxu0 0.0
      %800 = vmatpush2.msra.mxu0 0.0
      %801 = vmatprep.subr.mxu0 0.0
      %802 = vmatpush2.msra.mxu0 0.0
      %803 = vmatprep.subr.mxu0 0.0
      %804 = vmatpush2.msra.mxu0 0.0
      %805 = vmatprep.subr.mxu0 0.0
      %806 = vmatpush2.msra.mxu0 0.0
      %807 = vmatprep.subr.mxu0 0.0
      %808 = vmatpush2.msra.mxu0 0.0
      %809 = vmatprep.subr.mxu0 0.0
      %810 = vmatpush2.msra.mxu0 0.0
      %811 = vmatprep.subr.mxu0 0.0
      %812 = vmatpush2.msra.mxu0 0.0
      %813 = vmatprep.subr.mxu0 0.0
      %814 = vmatpush2.msra.mxu0 0.0
      %815 = vmatprep.subr.mxu0 0.0
      %816 = vmatpush2.msra.mxu0 0.0
      %817 = vmatprep.subr.mxu0 0.0
      %818 = vmatpush2.msra.mxu0 0.0
      %819 = vmatprep.mubr.f32.mxu0 0.0
      %820 = vmatmul.mubr.f32.gmra.mxu0 %v526
      %v821 = vpop.f32.mrf.mxu0
      %v822 = vadd.f32 %v753, %v821
      %v823 = vpop.f32.mrf.mxu0
      %824 = vdwg.mxu0
      %v825 = vadd.f32 %v729, %v822
      %v826 = vxor.u32 %v825, 2147483648
      %v827 = vmul.f32 %v826, 1.442695
      %v828 = vpow.pop %v827
      %v829 = vadd.f32 %v828, 1.0
      %v830 = vrcp.pop %v829
      %v831 = vmul.f32 1.0, %v830
      %832 = vrot.lane.b32.xlu0 %v831, 96
      %v833 = vpop.permute.xlu0 %832
      %v834 = vmul.f32 %v833, %v822
      %v835 = vadd.f32 %v729, %v834
      %v836 = vtanh.pop %v835
      %837 = vrot.lane.b32.xlu0 %v831, 64
      %v838 = vpop.permute.xlu0 %837
      %v839 = vsub.f32 1.0, %v838
      %v840 = vmul.f32 %v839, %v836
      %v841 = vmul.f32 %v838, %v526
      %v842 = vadd.f32 %v840, %v841
      %v843 = vsel %vm501, %v842, 0.0
      %844 = vst [vmem:[#allocation3] sm:$0xff] %v638
      %845 = vst [vmem:[#allocation4] sm:$0xff] %v843
      %s846 = scalar_lea.vmem [#allocation4], %s510
      %v847 = vld [vmem:[%s846] sm:$0x1]
      %s848 = scalar_lea.vmem [#allocation16], %s503
      %849 = vst [vmem:[%s848] sm:$0x1] %v847
    $region42: #{tpu_custom_call.1} parent=1 // loop_footer
      %s507 = sadd.s32 1, %s503
    $region43: #{tpu_custom_call.1} parent=1 // loop_footer_branch
      %502 = sbr.rel target = $region39
    $region44: #{tpu_custom_call.1} parent=1 // loop_exit
      _
    // Predicated region
    $region45: #{tpu_custom_call.1} parent=1 // pred_check
      _
    $region46: #{tpu_custom_call.1} parent=1 // pred_check_branch
      %851 = sbr.rel (0) target = $region48
    $region47: #{tpu_custom_call.1} parent=1 // pred_region
      %s853 = ssub.s32 256, 256
      %854 = vsyncadd [#allocation11], %s853
      %s855 = sshll.u32 [#allocation15], 4
      %s856 = int_to_ptr.vmem [resolvable:$true] %s855
      %861 = dma.vmem_to_hbm [thread:$0]  %s856, 256, %s9, [#allocation11], 128, 128, 8
    $region48: #{tpu_custom_call.1} parent=1 // pred_fallthru
      _
    // Predicated region
    $region49: #{tpu_custom_call.1} parent=1 // pred_check
      _
    $region50: #{tpu_custom_call.1} parent=1 // pred_check_branch
      %863 = sbr.rel (0) target = $region52
    $region51: #{tpu_custom_call.1} parent=1 // pred_region
      %s865 = ssub.s32 128, 128
      %866 = vsyncadd [#allocation17], %s865
      %s868 = sshll.u32 [#allocation16], 4
      %s869 = int_to_ptr.vmem [resolvable:$true] %s868
      %871 = dma.vmem_to_hbm [thread:$0]  %s869, 128, %s10, [#allocation17]
    $region52: #{tpu_custom_call.1} parent=1 // pred_fallthru
      _
    // Predicated region
    $region53: #{tpu_custom_call.1} parent=1 // pred_check
      _
    $region54: #{tpu_custom_call.1} parent=1 // pred_check_branch
      %873 = sbr.rel (0) target = $region56
    $region55: #{tpu_custom_call.1} parent=1 // pred_region
      %874 = dma.done [#allocation11], 256
    $region56: #{tpu_custom_call.1} parent=1 // pred_fallthru
      _
    // Predicated region
    $region57: #{tpu_custom_call.1} parent=1 // pred_check
      _
    $region58: #{tpu_custom_call.1} parent=1 // pred_check_branch
      %876 = sbr.rel (0) target = $region60
    $region59: #{tpu_custom_call.1} parent=1 // pred_region
      %877 = dma.done [#allocation17], 128
    $region60: #{tpu_custom_call.1} parent=1 // pred_fallthru
      _
    %878 = vsyncpa [#allocation10], 1
    %879 = vsyncpa [#allocation13], 1
    %880 = vsyncpa [#allocation11], 1
    %881 = vsyncpa [#allocation17], 1

</llo_original>
